<compile_context>
chip_gen: v5e
topology: v5e:2x2
jax: 0.10.0
libtpu: 0.0.40
codegen_flags: <defaults>
</compile_context>

<pallas_src>
import jax
import jax.numpy as jnp
from jax.experimental import pallas as pl
from jax.experimental.pallas import tpu as pltpu


def _one_plus_softplus_f32(x):
    """Numerically stable 1 + softplus, evaluated in f32."""
    xf = x.astype(jnp.float32)
    sp = jnp.maximum(xf, 0.0) + jnp.log1p(jnp.exp(-jnp.abs(xf)))
    return 1.0 + sp


def _beta_head_kernel(x_ref, o_ref):
    """Elementwise 1 + softplus over the whole lane-dense tile."""
    o_ref[...] = _one_plus_softplus_f32(x_ref[...]).astype(o_ref.dtype)


def _ceil_div(a, b):
    return -(-a // b)


def beta_forward(
    alpha_beta: jax.Array,
    action_dim: int,
    *,
    small_bytes: int = 2 * 1024 * 1024,   # input-bytes gate for the no-grid path
    lanes: int = 512,                     # lane width of the dense slab (mult of 128)
    block_rows: int | None = None,        # override row-tile of the gridded path
):
    """Pallas implementation of Beta.forward.

    Args:
      alpha_beta: [batch, 2*action_dim] float array.
      action_dim: number of action dimensions.
      small_bytes: if input nbytes <= small_bytes, run one VMEM-resident tile
        with no grid (in + out then occupy <= 2*small_bytes of VMEM).
      lanes: lane width for the lane-dense reshape (multiple of 128).
      block_rows: optional explicit row tile for the gridded path.

    Returns:
      (alpha, beta): each [batch, action_dim], same dtype as the input.
    """
    batch, feat = alpha_beta.shape
    assert feat == 2 * action_dim, "expected feature dim == 2 * action_dim"
    assert lanes % 128 == 0, "lanes must be a multiple of 128"
    dtype = alpha_beta.dtype
    itemsize = jnp.dtype(dtype).itemsize
    nbytes = batch * feat * itemsize

    if nbytes <= small_bytes:
        # Tiny policy head: one VMEM-resident tile, no grid / no pipeline
        # bookkeeping, no reshuffling.
        out = pl.pallas_call(
            _beta_head_kernel,
            out_shape=jax.ShapeDtypeStruct((batch, feat), dtype),
            in_specs=[pl.BlockSpec(memory_space=pltpu.MemorySpace.VMEM)],
            out_specs=pl.BlockSpec(memory_space=pltpu.MemorySpace.VMEM),
        )(alpha_beta)
    else:
        # Lane-dense slab: flatten row-major, pad the tail, view as (rows, lanes).
        n = batch * feat
        rows = _ceil_div(n, lanes)
        flat = alpha_beta.reshape(-1)
        pad = rows * lanes - n
        if pad:
            flat = jnp.pad(flat, (0, pad))
        x2d = flat.reshape(rows, lanes)

        # Row-tile sizing: ~2 MiB per block buffer; sublane multiple 8 (f32) /
        # 16 (bf16 / fp16).  Double-buffered in+out stays ~8 MiB of VMEM.
        sub = 16 if itemsize <= 2 else 8
        if block_rows is None:
            tb_target = max(sub, ((2 * 1024 * 1024) // (lanes * itemsize)) // sub * sub)
        else:
            tb_target = max(sub, (block_rows // sub) * sub)

        if rows <= tb_target:
            # Try to produce >= 2 grid blocks so both v7x TensorCores get work.
            half = _ceil_div(rows, 2)
            tb = _ceil_div(half, sub) * sub
            if tb >= rows:
                tb = rows  # single full-extent block (always a legal block shape)
        else:
            tb = tb_target

        grid = (_ceil_div(rows, tb),)
        out2d = pl.pallas_call(
            _beta_head_kernel,
            out_shape=jax.ShapeDtypeStruct((rows, lanes), dtype),
            grid=grid,
            in_specs=[pl.BlockSpec((tb, lanes), lambda i: (i, 0))],
            out_specs=pl.BlockSpec((tb, lanes), lambda i: (i, 0)),
            compiler_params=pltpu.CompilerParams(
                dimension_semantics=("parallel",)
            ),
        )(x2d)
        out = out2d.reshape(-1)[:n].reshape(batch, feat)

    # Alpha/beta split in the wrapper — keeps the kernel's stores lane-dense.
    return out[:, :action_dim], out[:, action_dim:]


def beta_forward_ref(alpha_beta: jax.Array, action_dim: int):
    """Pure-JAX reference for correctness checking."""
    a = alpha_beta[:, :action_dim]
    b = alpha_beta[:, action_dim:]
    return 1.0 + jax.nn.softplus(a), 1.0 + jax.nn.softplus(b)


def _check(alpha_beta, action_dim, **kw):
    alpha, beta = beta_forward(alpha_beta, action_dim, **kw)
    jax.block_until_ready((alpha, beta))
    alpha_r, beta_r = beta_forward_ref(alpha_beta, action_dim)
    assert alpha.shape == alpha_r.shape and beta.shape == beta_r.shape
    assert jnp.allclose(alpha.astype(jnp.float32), alpha_r.astype(jnp.float32),
                        atol=2e-3 if alpha.dtype == jnp.bfloat16 else 1e-5,
                        rtol=2e-2 if alpha.dtype == jnp.bfloat16 else 1e-5)
    assert jnp.allclose(beta.astype(jnp.float32), beta_r.astype(jnp.float32),
                        atol=2e-3 if beta.dtype == jnp.bfloat16 else 1e-5,
                        rtol=2e-2 if beta.dtype == jnp.bfloat16 else 1e-5)
    # Beta distribution parameters must be >= 1 (softplus >= 0).
    assert bool(jnp.all(alpha >= 1.0)) and bool(jnp.all(beta >= 1.0))


if __name__ == "__main__":
    key = jax.random.PRNGKey(0)
    k0, k1, k2, k3 = jax.random.split(key, 4)
    action_dim = 4

    # 1) Tiny policy head: no-grid VMEM path (the common RL case).
    ab_small = jax.random.normal(k0, (8, 2 * action_dim), dtype=jnp.float32) * 3.0
    _check(ab_small, action_dim)

    # 2) Lane-dense gridded path (forced with small_bytes=0, lanes=128):
    #    512 rows * 8 feat = 4096 elems -> (32, 128) slab, 2 grid blocks.
    ab_grid = jax.random.normal(k1, (512, 2 * action_dim), dtype=jnp.float32) * 3.0
    _check(ab_grid, action_dim, small_bytes=0, lanes=128)

    # 3) Gridded path with a ragged flat length (padding + partial/full-extent block).
    ab_ragged = jax.random.normal(k2, (100, 2 * 3), dtype=jnp.float32) * 3.0
    _check(ab_ragged, 3, small_bytes=0, lanes=128)

    # 4) bf16 input on the fast path (f32 internal transcendentals, cast back).
    ab_bf16 = (jax.random.normal(k3, (16, 2 * action_dim), dtype=jnp.float32) * 3.0
               ).astype(jnp.bfloat16)
    _check(ab_bf16, action_dim)

    print("KERNEL_OK")
</pallas_src>

<mosaic_0001>
module attributes {stable_mosaic.version = 11 : i64} {
  func.func @_beta_head_kernel(%arg0: memref<8x8xf32, #tpu.memory_space<vmem>>, %arg1: memref<8x8xf32, #tpu.memory_space<vmem>>) attributes {dimension_semantics = [], scalar_prefetch = 0 : i64, scratch_operands = 0 : i64, tpu.core_type = #tpu.core_type<tc>} {
    %c0 = arith.constant 0 : index
    %c0_0 = arith.constant 0 : index
    %0 = vector.load %arg0[%c0, %c0_0] : memref<8x8xf32, #tpu.memory_space<vmem>>, vector<8x8xf32>
    %cst = arith.constant 0.000000e+00 : f32
    %1 = vector.broadcast %cst : f32 to vector<8x8xf32>
    %2 = arith.maximumf %0, %1 : vector<8x8xf32>
    %3 = math.absf %0 : vector<8x8xf32>
    %cst_1 = arith.constant 0.000000e+00 : f32
    %4 = vector.broadcast %cst_1 : f32 to vector<8x8xf32>
    %5 = arith.subf %4, %3 : vector<8x8xf32>
    %6 = math.exp %5 : vector<8x8xf32>
    %7 = math.log1p %6 : vector<8x8xf32>
    %8 = arith.addf %2, %7 : vector<8x8xf32>
    %cst_2 = arith.constant 1.000000e+00 : f32
    %9 = vector.broadcast %cst_2 : f32 to vector<8x8xf32>
    %10 = arith.addf %9, %8 : vector<8x8xf32>
    %c0_3 = arith.constant 0 : index
    %c0_4 = arith.constant 0 : index
    %11 = vector.load %arg1[%c0_3, %c0_4] : memref<8x8xf32, #tpu.memory_space<vmem>>, vector<8x8xf32>
    tpu.vector_store %arg1[%c0_3, %c0_4], %10 {strides = array<i32>} : memref<8x8xf32, #tpu.memory_space<vmem>>, vector<8x8xf32>,
    return
  }
}

</mosaic_0001>

<llo_original>
// kernel: tpu_custom_call.1
$region0: #{tpu_custom_call.1}
  #allocation0 [shape = 'u32[]', space=smem, size = 0x4, offset = 0x4, fixed_abs, tag = 'smem constant byte address 0x4 - core index']
  #allocation1 [shape = 'u32[72,128]{1,0:T(1,128)}', space=vmem, size = 0x9000, scoped, tag = 'internal scratch']
  %s0 = inlined_call_operand.hbm [shape: f32[8,8], index: 0, kind: input, shape index: {}]
  %s1 = inlined_call_operand.hbm [shape: f32[8,8], index: 1, kind: output, shape index: {}]
  %s2 = sld [smem:[#allocation0]]
  $region18: #{tpu_custom_call.1} parent=0
    _
  %s4 = ssub.s32 1, %s2
  %s5 = scalar_select 0, %s4, %s2
  $region1: #{tpu_custom_call.1} parent=0
    #allocation2 [shape = 'u8[4096]{0}', space=vmem, size = 0x1000, scoped, tag = 'input window, operand 0, single buffered']
    #allocation3 [shape = 's32[1]{0}', space=sflag, size = 0x4, scoped, tag = 'scoped memory for tpu_custom_call.1']
    #allocation4 [shape = 's32[1]{0}', space=sflag, size = 0x4, scoped, tag = 'scoped memory for tpu_custom_call.1']
    #allocation5 [shape = 'u8[4096]{0}', space=vmem, size = 0x1000, scoped, tag = 'output window, operand 0, single buffered']
    %6 = vsyncpa [#allocation3], 0
    %7 = vsyncpa [#allocation4], 0
    // Predicated region
    $region2: #{tpu_custom_call.1} parent=1 // pred_check
      _
    $region3: #{tpu_custom_call.1} parent=1 // pred_check_branch
      %9 = sbr.rel (0) target = $region5
    $region4: #{tpu_custom_call.1} parent=1 // pred_region
      %11 = vsyncadd [#allocation3], 0
      %s13 = sshll.u32 %s0, 4
      %s14 = int_to_ptr.hbm [resolvable:$true] %s13
      %s15 = sshll.u32 [#allocation2], 4
      %s16 = int_to_ptr.vmem [resolvable:$true] %s15
      %18 = dma.hbm_to_vmem [thread:$0]  %s14, 128, %s16, [#allocation3]
    $region5: #{tpu_custom_call.1} parent=1 // pred_fallthru
      _
    // Predicated region
    $region6: #{tpu_custom_call.1} parent=1 // pred_check
      _
    $region7: #{tpu_custom_call.1} parent=1 // pred_check_branch
      %20 = sbr.rel (0) target = $region9
    $region8: #{tpu_custom_call.1} parent=1 // pred_region
      %22 = dma.done [#allocation3], 128
    $region9: #{tpu_custom_call.1} parent=1 // pred_fallthru
      _
    %v23 = vld [vmem:[#allocation2] sm:$0xff]
    %v24 = vmax.f32 %v23, 0.0
    %v25 = vand.u32 2147483647, %v23
    %v26 = vsub.f32 0.0, %v25
    %v27 = vmul.f32 %v26, 1.442695
    %v28 = vpow.pop %v27
    %v29 = vadd.f32 %v28, 1.0
    %v30 = vlog2.pop %v29
    %v31 = vmul.f32 %v30, 0.6931472
    %v32 = vmul.f32 -0.5, %v28
    %v33 = vadd.f32 %v32, 1.0
    %v34 = vmul.f32 %v33, %v28
    %v35 = vand.u32 2147483647, %v28
    %vm36 = vcmp.lt.f32.partialorder %v35, 0.0004427343
    %v37 = vsel %vm36, %v34, %v31
    %v38 = vadd.f32 %v24, %v37
    %v39 = vadd.f32 %v38, 1.0
    %vm40 = vcmask 64512
    %41 = vst.msk [vmem:[#allocation5] sm:$0xff] %vm40, %v39
    // Predicated region
    $region10: #{tpu_custom_call.1} parent=1 // pred_check
      _
    $region11: #{tpu_custom_call.1} parent=1 // pred_check_branch
      %43 = sbr.rel (0) target = $region13
    $region12: #{tpu_custom_call.1} parent=1 // pred_region
      %45 = vsyncadd [#allocation4], 0
      %s47 = sshll.u32 [#allocation5], 4
      %s48 = int_to_ptr.vmem [resolvable:$true] %s47
      %s49 = sshll.u32 %s1, 4
      %s50 = int_to_ptr.hbm [resolvable:$true] %s49
      %52 = dma.vmem_to_hbm [thread:$0]  %s48, 128, %s50, [#allocation4]
    $region13: #{tpu_custom_call.1} parent=1 // pred_fallthru
      _
    // Predicated region
    $region14: #{tpu_custom_call.1} parent=1 // pred_check
      _
    $region15: #{tpu_custom_call.1} parent=1 // pred_check_branch
      %54 = sbr.rel (0) target = $region17
    $region16: #{tpu_custom_call.1} parent=1 // pred_region
      %56 = dma.done [#allocation4], 128
    $region17: #{tpu_custom_call.1} parent=1 // pred_fallthru
      _
    %57 = vsyncpa [#allocation3], 1
    %58 = vsyncpa [#allocation4], 1

</llo_original>
